<compile_context>
chip_gen: v7x
topology: tpu7x:2x2x1
jax: 0.10.0
libtpu: 0.0.40
codegen_flags: <defaults>
</compile_context>

<pallas_src>
import jax
import jax.numpy as jnp
from jax.experimental import pallas as pl
from jax.experimental.pallas import tpu as pltpu


def _round_up(v, m):
    return ((v + m - 1) // m) * m


def _xw_kernel(x_ref, w_ref, o_ref):
    # XW = X @ W, hoisted out of the aggregation loop, computed once (MXU, f32 acc).
    o_ref[...] = jnp.dot(
        x_ref[...], w_ref[...], preferred_element_type=jnp.float32
    ).astype(o_ref.dtype)


def _make_agg_kernel(tk, xw_resident):
    def kernel(a_ref, xw_ref, dis_r_ref, dis_c_ref, b_ref, o_ref):
        # grid = (row_blocks, col_blocks); columns are the reduction axis (last, "arbitrary").
        k = pl.program_id(1)

        @pl.when(k == 0)
        def _init():
            o_ref[...] = jnp.zeros_like(o_ref)  # accumulate directly in the f32 output block

        # Fused D^{-1/2} (A+I) D^{-1/2}: scale the raw bf16 (A+I) tile in f32 on the VPU
        # (free under the HBM-bound stream), then feed the MXU in bf16.
        a = (
            a_ref[...].astype(jnp.float32) * dis_r_ref[...] * dis_c_ref[...]
        ).astype(jnp.bfloat16)

        if xw_resident:
            # XW lives fully in VMEM (constant block index -> DMA'd once); slice the k-chunk.
            off = pl.multiple_of(k * tk, tk)
            xw = xw_ref[pl.ds(off, tk), :]
        else:
            xw = xw_ref[...]

        o_ref[...] += jnp.dot(a, xw, preferred_element_type=jnp.float32)

        @pl.when(k == pl.num_programs(1) - 1)
        def _epilogue():
            o_ref[...] = jax.nn.sigmoid(o_ref[...] + b_ref[...])

    return kernel


def bernoulli_density_forward(x, edge_index, weight, bias):
    """x: [N, hidden] f32, edge_index: [2, E] int32,
       weight: [hidden, out_dim] f32, bias: [out_dim] f32 -> probs [N, out_dim] f32."""
    n, hidden = x.shape
    out_dim = weight.shape[1]

    # ---- tile / padding selection ----
    o_pad = _round_up(out_dim, 128)          # lane-dense output; do NOT over-pad (HBM bound)
    if n <= 1024:
        n_pad = _round_up(n, 128)
        tk = n_pad                           # single reduction step
        # >= 2 row blocks whenever possible so both v7x TensorCores get work.
        tm = n_pad if n_pad <= 128 else n_pad // 2
    else:
        tm, tk = 512, 2048                   # >=2 MiB bf16 A tile: past the step-overhead knee
        n_pad = _round_up(n, tk)

    # ---- glue (plain JAX): O(E) degree + ONE scatter build of (A+I) at padded shape, bf16 ----
    src, dst = edge_index[0], edge_index[1]
    loop = jnp.arange(n, dtype=edge_index.dtype)
    srcs = jnp.concatenate([src, loop])
    dsts = jnp.concatenate([dst, loop])
    # raw A+I built directly at padded shape in bf16 (small integer counts are exact in bf16)
    adj = jnp.zeros((n_pad, n_pad), jnp.bfloat16).at[dsts, srcs].add(1.0)
    # in-degree from the edge list (includes self loop -> always >= 1, no guard needed)
    deg = jnp.ones((n,), jnp.float32).at[dst].add(1.0)
    dis = 1.0 / jnp.sqrt(deg)
    dis_p = jnp.pad(dis, (0, n_pad - n))     # zero-padded rows/cols stay zero after scaling
    dis_row = dis_p.reshape(n_pad, 1)
    dis_col = dis_p.reshape(1, n_pad)
    # TODO(synk): for very large sparse graphs replace the dense O(N^2) adjacency with a
    # CSR / segment-sum aggregation path (PrefetchScalarGridSpec row-pointer gather).

    x_p = jnp.pad(x, ((0, n_pad - n), (0, 0))).astype(jnp.bfloat16)
    w_p = jnp.pad(weight, ((0, 0), (0, o_pad - out_dim))).astype(jnp.bfloat16)
    b_p = jnp.pad(bias, (0, o_pad - out_dim)).astype(jnp.float32).reshape(1, o_pad)

    vmem_limit = 48 * 1024 * 1024            # fine on v5e/v6e (128 MiB), under v7x's 64 MiB
    cparams_1d = pltpu.CompilerParams(
        dimension_semantics=("parallel",), vmem_limit_bytes=vmem_limit)
    cparams_2d = pltpu.CompilerParams(
        dimension_semantics=("parallel", "arbitrary"), vmem_limit_bytes=vmem_limit)

    # ---- kernel 1: XW = X @ W, computed once ----
    xw = pl.pallas_call(
        _xw_kernel,
        out_shape=jax.ShapeDtypeStruct((n_pad, o_pad), jnp.bfloat16),
        grid=(n_pad // tm,),
        in_specs=[
            pl.BlockSpec((tm, hidden), lambda i: (i, 0)),      # X row block
            pl.BlockSpec((hidden, o_pad), lambda i: (0, 0)),   # W resident
        ],
        out_specs=pl.BlockSpec((tm, o_pad), lambda i: (i, 0)),
        compiler_params=cparams_1d,
    )(x_p, w_p)

    # ---- kernel 2: sigmoid(D^-1/2 (A+I) D^-1/2 @ XW + b), tiled over the dense A stream ----
    xw_resident = (n_pad * o_pad * 2) <= 4 * 1024 * 1024   # double-buffered copy stays <= 8 MiB
    if xw_resident:
        xw_spec = pl.BlockSpec((n_pad, o_pad), lambda i, k: (0, 0))   # constant index -> 1 DMA
    else:
        xw_spec = pl.BlockSpec((tk, o_pad), lambda i, k: (k, 0))      # stream per k block

    probs = pl.pallas_call(
        _make_agg_kernel(tk, xw_resident),
        out_shape=jax.ShapeDtypeStruct((n_pad, o_pad), jnp.float32),
        grid=(n_pad // tm, n_pad // tk),
        in_specs=[
            pl.BlockSpec((tm, tk), lambda i, k: (i, k)),       # raw (A+I) tile, bf16 stream
            xw_spec,                                           # XW (bf16)
            pl.BlockSpec((tm, 1), lambda i, k: (i, 0)),        # D^{-1/2} rows (f32)
            pl.BlockSpec((1, tk), lambda i, k: (0, k)),        # D^{-1/2} cols (f32)
            pl.BlockSpec((1, o_pad), lambda i, k: (0, 0)),     # bias, resident (f32)
        ],
        out_specs=pl.BlockSpec((tm, o_pad), lambda i, k: (i, 0)),
        compiler_params=cparams_2d,
    )(adj, xw, dis_row, dis_col, b_p)

    return probs[:n, :out_dim]


def _reference(x, edge_index, weight, bias):
    """Plain-JAX f32 reference (PyG GCNConv semantics with add_self_loops)."""
    n = x.shape[0]
    src, dst = edge_index[0], edge_index[1]
    loop = jnp.arange(n, dtype=edge_index.dtype)
    srcs = jnp.concatenate([src, loop])
    dsts = jnp.concatenate([dst, loop])
    adj = jnp.zeros((n, n), jnp.float32).at[dsts, srcs].add(1.0)
    deg = jnp.sum(adj, axis=1)
    dis = jnp.where(deg > 0, 1.0 / jnp.sqrt(deg), 0.0)
    a_hat = dis[:, None] * adj * dis[None, :]
    logits = a_hat @ (x @ weight) + bias[None, :]
    return jax.nn.sigmoid(logits)


if __name__ == "__main__":
    key = jax.random.PRNGKey(0)
    k_x, k_w, k_e = jax.random.split(key, 3)

    num_nodes = 16
    hidden_dim = 32
    output_dim = 8
    num_edges = 40

    # deterministic synthetic inputs / parameters
    x = jax.random.normal(k_x, (num_nodes, hidden_dim), jnp.float32)

    # GCNConv params: glorot-style weight [hidden_dim, output_dim], zero bias
    limit = jnp.sqrt(6.0 / (hidden_dim + output_dim))
    weight = jax.random.uniform(
        k_w, (hidden_dim, output_dim), jnp.float32, minval=-limit, maxval=limit
    )
    bias = jnp.zeros((output_dim,), jnp.float32)

    edge_index = jax.random.randint(
        k_e, (2, num_edges), minval=0, maxval=num_nodes, dtype=jnp.int32
    )

    probs = bernoulli_density_forward(x, edge_index, weight, bias)
    probs = jax.block_until_ready(probs)

    # sanity: shape, valid probabilities, and loose-tolerance match vs f32 reference
    # (bf16 MXU operands -> ~1e-2 class error on logits, much smaller after sigmoid)
    assert probs.shape == (num_nodes, output_dim)
    assert bool(jnp.all((probs > 0.0) & (probs < 1.0)))
    ref = _reference(x, edge_index, weight, bias)
    assert bool(jnp.all(jnp.abs(probs - ref) < 2.5e-2))
    print("KERNEL_OK")
</pallas_src>

<mosaic_0001>
module attributes {stable_mosaic.version = 11 : i64} {
  func.func @_xw_kernel(%arg0: i32, %arg1: memref<128x32xbf16, #tpu.memory_space<vmem>>, %arg2: memref<32x128xbf16, #tpu.memory_space<vmem>>, %arg3: memref<128x128xbf16, #tpu.memory_space<vmem>>) attributes {dimension_semantics = [#tpu.dimension_semantics<parallel>], iteration_bounds = array<i64: 1>, scalar_prefetch = 0 : i64, scratch_operands = 0 : i64, tpu.core_type = #tpu.core_type<tc>, window_params = [{transform_indices = @transform_0, window_bounds = array<i64: 128, 32>}, {pipeline_mode = #tpu.pipeline_mode<synchronous>, transform_indices = @transform_1, window_bounds = array<i64: 32, 128>}, {transform_indices = @transform_2, window_bounds = array<i64: 128, 128>}]} {
    %c0 = arith.constant 0 : index
    %c0_0 = arith.constant 0 : index
    %0 = vector.load %arg1[%c0, %c0_0] : memref<128x32xbf16, #tpu.memory_space<vmem>>, vector<128x32xbf16>
    %c0_1 = arith.constant 0 : index
    %c0_2 = arith.constant 0 : index
    %1 = vector.load %arg2[%c0_1, %c0_2] : memref<32x128xbf16, #tpu.memory_space<vmem>>, vector<32x128xbf16>
    %cst = arith.constant dense<0.000000e+00> : vector<128x128xf32>
    %2 = tpu.matmul %0, %1, %cst {dimension_numbers = #tpu.dot_dimension_numbers<[1], [0], [0], [1], [0, 0, 1, 1], [], []>} : vector<128x32xbf16>, vector<32x128xbf16>, vector<128x128xf32> -> vector<128x128xf32>
    %3 = arith.truncf %2 : vector<128x128xf32> to vector<128x128xbf16>
    %c0_3 = arith.constant 0 : index
    %c0_4 = arith.constant 0 : index
    %4 = vector.load %arg3[%c0_3, %c0_4] : memref<128x128xbf16, #tpu.memory_space<vmem>>, vector<128x128xbf16>
    tpu.vector_store %arg3[%c0_3, %c0_4], %3 {strides = array<i32>} : memref<128x128xbf16, #tpu.memory_space<vmem>>, vector<128x128xbf16>,
    return
  }
  func.func @transform_0(%arg0: i32) -> (i32, i32) {
    %c0_i32 = arith.constant 0 : i32
    %c0_i32_0 = arith.constant 0 : i32
    return %arg0, %c0_i32 : i32, i32
  }
  func.func @transform_1(%arg0: i32) -> (i32, i32) {
    %c0_i32 = arith.constant 0 : i32
    %c0_i32_0 = arith.constant 0 : i32
    %c0_i32_1 = arith.constant 0 : i32
    return %c0_i32, %c0_i32_0 : i32, i32
  }
  func.func @transform_2(%arg0: i32) -> (i32, i32) {
    %c0_i32 = arith.constant 0 : i32
    %c0_i32_0 = arith.constant 0 : i32
    return %arg0, %c0_i32 : i32, i32
  }
}

</mosaic_0001>

<llo_original>
// kernel: tpu_custom_call.1
$region0: #{tpu_custom_call.1}
  #allocation0 [shape = 'u32[]', space=smem, size = 0x4, offset = 0x4, fixed_abs, tag = 'smem constant byte address 0x4 - core index']
  #allocation1 [shape = 'u32[144,128]{1,0:T(1,128)}', space=vmem, size = 0x12000, scoped, tag = 'internal scratch']
  %s0 = inlined_call_operand.vmem [shape: bf16[128,32], index: 0, kind: input, shape index: {}]
  %s1 = inlined_call_operand.vmem [shape: bf16[32,128], index: 1, kind: input, shape index: {}]
  %s2 = inlined_call_operand.hbm [shape: bf16[128,128], index: 2, kind: output, shape index: {}]
  %s3 = sld [smem:[#allocation0]]
  $region18: #{tpu_custom_call.1} parent=0
    _
  %s5 = ssub.s32 1, %s3
  %s6 = scalar_select 0, %s5, %s3
  $region1: #{tpu_custom_call.1} parent=0
    #allocation2 [shape = 'u8[32768]{0}', space=vmem, size = 0x8000, scoped, tag = 'output window, operand 0, single buffered']
    #allocation3 [shape = 's32[1]{0}', space=sflag, size = 0x4, scoped, tag = 'scoped memory for tpu_custom_call.1']
    %7 = vsyncpa [#allocation3], 0
    // Predicated region
    $region2: #{tpu_custom_call.1} parent=1 // pred_check
      _
    $region3: #{tpu_custom_call.1} parent=1 // pred_check_branch
      %9 = sbr.rel (0) target = $region5
    $region4: #{tpu_custom_call.1} parent=1 // pred_region
      _
    $region5: #{tpu_custom_call.1} parent=1 // pred_fallthru
      _
    // Predicated region
    $region6: #{tpu_custom_call.1} parent=1 // pred_check
      _
    $region7: #{tpu_custom_call.1} parent=1 // pred_check_branch
      %11 = sbr.rel (0) target = $region9
    $region8: #{tpu_custom_call.1} parent=1 // pred_region
      _
    $region9: #{tpu_custom_call.1} parent=1 // pred_fallthru
      _
    %v13 = vld [vmem:[%s0] sm:$0xf]
    %v14 = vld [vmem:[%s0 + $0x4] sm:$0xf]
    %v15 = vld [vmem:[%s0 + $0x8] sm:$0xf]
    %v16 = vld [vmem:[%s0 + $0xc] sm:$0xf]
    %v17 = vld [vmem:[%s0 + $0x10] sm:$0xf]
    %v18 = vld [vmem:[%s0 + $0x14] sm:$0xf]
    %v19 = vld [vmem:[%s0 + $0x18] sm:$0xf]
    %v20 = vld [vmem:[%s0 + $0x1c] sm:$0xf]
    %v21 = vld [vmem:[%s0 + $0x20] sm:$0xf]
    %v22 = vld [vmem:[%s0 + $0x24] sm:$0xf]
    %v23 = vld [vmem:[%s0 + $0x28] sm:$0xf]
    %v24 = vld [vmem:[%s0 + $0x2c] sm:$0xf]
    %v25 = vld [vmem:[%s0 + $0x30] sm:$0xf]
    %v26 = vld [vmem:[%s0 + $0x34] sm:$0xf]
    %v27 = vld [vmem:[%s0 + $0x38] sm:$0xf]
    %v28 = vld [vmem:[%s0 + $0x3c] sm:$0xf]
    %v29 = vld [vmem:[%s1] sm:$0xf]
    %v30 = vld [vmem:[%s1 + $0x4] sm:$0xf]
    %v31 = vld [vmem:[%s1 + $0x8] sm:$0xf]
    %v32 = vld [vmem:[%s1 + $0xc] sm:$0xf]
    %v49 = vunpack.c.l.b16 %v13
    %v50 = vunpack.c.l.b16 %v14
    %v51 = vunpack.c.l.b16 %v15
    %v52 = vunpack.c.l.b16 %v16
    %v53 = vunpack.c.l.b16 %v17
    %v54 = vunpack.c.l.b16 %v18
    %v55 = vunpack.c.l.b16 %v19
    %v56 = vunpack.c.l.b16 %v20
    %v57 = vunpack.c.l.b16 %v21
    %v58 = vunpack.c.l.b16 %v22
    %v59 = vunpack.c.l.b16 %v23
    %v60 = vunpack.c.l.b16 %v24
    %v61 = vunpack.c.l.b16 %v25
    %v62 = vunpack.c.l.b16 %v26
    %v63 = vunpack.c.l.b16 %v27
    %v64 = vunpack.c.l.b16 %v28
    %v65 = vpack.c.b16 %v50, %v49
    %v66 = vpack.c.b16 %v52, %v51
    %v67 = vpack.c.b16 %v54, %v53
    %v68 = vpack.c.b16 %v56, %v55
    %v69 = vpack.c.b16 %v58, %v57
    %v70 = vpack.c.b16 %v60, %v59
    %v71 = vpack.c.b16 %v62, %v61
    %v72 = vpack.c.b16 %v64, %v63
    %v77 = vunpack.c.l.b16 %v29
    %v78 = vunpack.c.l.b16 %v30
    %v79 = vunpack.c.l.b16 %v31
    %v80 = vunpack.c.l.b16 %v32
    %v81 = vpack.c.b16 %v78, %v77
    %v82 = vpack.c.b16 %v80, %v79
    %vm85 = vcmask 261120
    %v87 = vsel %vm85, %v65, 0
    %v90 = vsel %vm85, %v66, 0
    %v93 = vsel %vm85, %v67, 0
    %v96 = vsel %vm85, %v68, 0
    %v99 = vsel %vm85, %v69, 0
    %v102 = vsel %vm85, %v70, 0
    %v105 = vsel %vm85, %v71, 0
    %v108 = vsel %vm85, %v72, 0
    %110 = vmatprep.subr.bf16.mxu0 0
    %111 = vmatpush1.bf16.msra.mxu0 %v81
    %112 = vmatprep.subr.bf16.mxu0 0
    %113 = vmatpush1.bf16.msra.mxu0 %v82
    %114 = vmatprep.subr.bf16.mxu0 0
    %115 = vmatpush1.bf16.msra.mxu0 0
    %116 = vmatprep.subr.bf16.mxu0 0
    %117 = vmatpush1.bf16.msra.mxu0 0
    %118 = vmatprep.subr.bf16.mxu0 0
    %119 = vmatpush1.bf16.msra.mxu0 0
    %120 = vmatprep.subr.bf16.mxu0 0
    %121 = vmatpush1.bf16.msra.mxu0 0
    %122 = vmatprep.subr.bf16.mxu0 0
    %123 = vmatpush1.bf16.msra.mxu0 0
    %124 = vmatprep.subr.bf16.mxu0 0
    %125 = vmatpush1.bf16.msra.mxu0 0
    %126 = vmatprep.subr.bf16.mxu0 0
    %127 = vmatpush1.bf16.msra.mxu0 0
    %128 = vmatprep.subr.bf16.mxu0 0
    %129 = vmatpush1.bf16.msra.mxu0 0
    %130 = vmatprep.subr.bf16.mxu0 0
    %131 = vmatpush1.bf16.msra.mxu0 0
    %132 = vmatprep.subr.bf16.mxu0 0
    %133 = vmatpush1.bf16.msra.mxu0 0
    %134 = vmatprep.subr.bf16.mxu0 0
    %135 = vmatpush1.bf16.msra.mxu0 0
    %136 = vmatprep.subr.bf16.mxu0 0
    %137 = vmatpush1.bf16.msra.mxu0 0
    %138 = vmatprep.subr.bf16.mxu0 0
    %139 = vmatpush1.bf16.msra.mxu0 0
    %140 = vmatprep.subr.bf16.mxu0 0
    %141 = vmatpush1.bf16.msra.mxu0 0
    %142 = vmatprep.mubr.bf16.mxu0 0
    %143 = vmatmul.mubr.bf16.gmra.mrb[0].mxu0 %v87
    %v144 = vpop.f32.mrb[0].mxu0
    %v145 = vadd.f32 0.0, %v144
    %v146 = vpop.f32.mrb[0].mxu0
    %v147 = vpop.f32.mrb[0].mxu0
    %v148 = vadd.f32 0.0, %v147
    %v149 = vpop.f32.mrb[0].mxu0
    %150 = vmatprep.mubr.bf16.mxu0 0
    %151 = vmatmul.mubr.bf16.gmra.mrb[0].mxu0 %v90
    %v152 = vpop.f32.mrb[0].mxu0
    %v153 = vadd.f32 0.0, %v152
    %v154 = vpop.f32.mrb[0].mxu0
    %v155 = vpop.f32.mrb[0].mxu0
    %v156 = vadd.f32 0.0, %v155
    %v157 = vpop.f32.mrb[0].mxu0
    %158 = vmatprep.mubr.bf16.mxu0 0
    %159 = vmatmul.mubr.bf16.gmra.mrb[0].mxu0 %v93
    %v160 = vpop.f32.mrb[0].mxu0
    %v161 = vadd.f32 0.0, %v160
    %v162 = vpop.f32.mrb[0].mxu0
    %v163 = vpop.f32.mrb[0].mxu0
    %v164 = vadd.f32 0.0, %v163
    %v165 = vpop.f32.mrb[0].mxu0
    %166 = vmatprep.mubr.bf16.mxu0 0
    %167 = vmatmul.mubr.bf16.gmra.mrb[0].mxu0 %v96
    %v168 = vpop.f32.mrb[0].mxu0
    %v169 = vadd.f32 0.0, %v168
    %v170 = vpop.f32.mrb[0].mxu0
    %v171 = vpop.f32.mrb[0].mxu0
    %v172 = vadd.f32 0.0, %v171
    %v173 = vpop.f32.mrb[0].mxu0
    %174 = vmatprep.mubr.bf16.mxu0 0
    %175 = vmatmul.mubr.bf16.gmra.mrb[0].mxu0 %v99
    %v176 = vpop.f32.mrb[0].mxu0
    %v177 = vadd.f32 0.0, %v176
    %v178 = vpop.f32.mrb[0].mxu0
    %v179 = vpop.f32.mrb[0].mxu0
    %v180 = vadd.f32 0.0, %v179
    %v181 = vpop.f32.mrb[0].mxu0
    %182 = vmatprep.mubr.bf16.mxu0 0
    %183 = vmatmul.mubr.bf16.gmra.mrb[0].mxu0 %v102
    %v184 = vpop.f32.mrb[0].mxu0
    %v185 = vadd.f32 0.0, %v184
    %v186 = vpop.f32.mrb[0].mxu0
    %v187 = vpop.f32.mrb[0].mxu0
    %v188 = vadd.f32 0.0, %v187
    %v189 = vpop.f32.mrb[0].mxu0
    %190 = vmatprep.mubr.bf16.mxu0 0
    %191 = vmatmul.mubr.bf16.gmra.mrb[0].mxu0 %v105
    %v192 = vpop.f32.mrb[0].mxu0
    %v193 = vadd.f32 0.0, %v192
    %v194 = vpop.f32.mrb[0].mxu0
    %v195 = vpop.f32.mrb[0].mxu0
    %v196 = vadd.f32 0.0, %v195
    %v197 = vpop.f32.mrb[0].mxu0
    %198 = vmatprep.mubr.bf16.mxu0 0
    %199 = vmatmul.mubr.bf16.gmra.mrb[0].mxu0 %v108
    %v200 = vpop.f32.mrb[0].mxu0
    %v201 = vadd.f32 0.0, %v200
    %v202 = vpop.f32.mrb[0].mxu0
    %v203 = vpop.f32.mrb[0].mxu0
    %v204 = vadd.f32 0.0, %v203
    %v205 = vpop.f32.mrb[0].mxu0
    %206 = vdwg.mxu0
    %v207 = vpack.c.bf16 %v148, %v145
    %v208 = vpack.c.bf16 %v156, %v153
    %v209 = vpack.c.bf16 %v164, %v161
    %v210 = vpack.c.bf16 %v172, %v169
    %v211 = vpack.c.bf16 %v180, %v177
    %v212 = vpack.c.bf16 %v188, %v185
    %v213 = vpack.c.bf16 %v196, %v193
    %v214 = vpack.c.bf16 %v204, %v201
    %v223 = vunpack.c.l.b16 %v207
    %v224 = vunpack.c.h.b16 %v207
    %v225 = vunpack.c.l.b16 %v208
    %v226 = vunpack.c.h.b16 %v208
    %v227 = vunpack.c.l.b16 %v209
    %v228 = vunpack.c.h.b16 %v209
    %v229 = vunpack.c.l.b16 %v210
    %v230 = vunpack.c.h.b16 %v210
    %v231 = vunpack.c.l.b16 %v211
    %v232 = vunpack.c.h.b16 %v211
    %v233 = vunpack.c.l.b16 %v212
    %v234 = vunpack.c.h.b16 %v212
    %v235 = vunpack.c.l.b16 %v213
    %v236 = vunpack.c.h.b16 %v213
    %v237 = vunpack.c.l.b16 %v214
    %v238 = vunpack.c.h.b16 %v214
    %v239 = vpack.c.b16 %v223, %v223
    %v240 = vpack.c.b16 %v224, %v224
    %v241 = vpack.c.b16 %v225, %v225
    %v242 = vpack.c.b16 %v226, %v226
    %v243 = vpack.c.b16 %v227, %v227
    %v244 = vpack.c.b16 %v228, %v228
    %v245 = vpack.c.b16 %v229, %v229
    %v246 = vpack.c.b16 %v230, %v230
    %v247 = vpack.c.b16 %v231, %v231
    %v248 = vpack.c.b16 %v232, %v232
    %v249 = vpack.c.b16 %v233, %v233
    %v250 = vpack.c.b16 %v234, %v234
    %v251 = vpack.c.b16 %v235, %v235
    %v252 = vpack.c.b16 %v236, %v236
    %v253 = vpack.c.b16 %v237, %v237
    %v254 = vpack.c.b16 %v238, %v238
    %271 = vst [vmem:[#allocation2] sm:$0xf] %v239
    %272 = vst [vmem:[#allocation2 + $0x4] sm:$0xf] %v240
    %273 = vst [vmem:[#allocation2 + $0x8] sm:$0xf] %v241
    %274 = vst [vmem:[#allocation2 + $0xc] sm:$0xf] %v242
    %275 = vst [vmem:[#allocation2 + $0x10] sm:$0xf] %v243
    %276 = vst [vmem:[#allocation2 + $0x14] sm:$0xf] %v244
    %277 = vst [vmem:[#allocation2 + $0x18] sm:$0xf] %v245
    %278 = vst [vmem:[#allocation2 + $0x1c] sm:$0xf] %v246
    %279 = vst [vmem:[#allocation2 + $0x20] sm:$0xf] %v247
    %280 = vst [vmem:[#allocation2 + $0x24] sm:$0xf] %v248
    %281 = vst [vmem:[#allocation2 + $0x28] sm:$0xf] %v249
    %282 = vst [vmem:[#allocation2 + $0x2c] sm:$0xf] %v250
    %283 = vst [vmem:[#allocation2 + $0x30] sm:$0xf] %v251
    %284 = vst [vmem:[#allocation2 + $0x34] sm:$0xf] %v252
    %285 = vst [vmem:[#allocation2 + $0x38] sm:$0xf] %v253
    %286 = vst [vmem:[#allocation2 + $0x3c] sm:$0xf] %v254
    // Predicated region
    $region10: #{tpu_custom_call.1} parent=1 // pred_check
      _
    $region11: #{tpu_custom_call.1} parent=1 // pred_check_branch
      %288 = sbr.rel (0) target = $region13
    $region12: #{tpu_custom_call.1} parent=1 // pred_region
      %s290 = ssub.s32 1024, 1024
      %291 = vsyncadd [#allocation3], %s290
      %s292 = sshll.u32 [#allocation2], 4
      %s293 = int_to_ptr.vmem [resolvable:$true] %s292
      %298 = dma.vmem_to_hbm [thread:$0]  %s293, 1024, %s2, [#allocation3], 64, 64, 4
    $region13: #{tpu_custom_call.1} parent=1 // pred_fallthru
      _
    // Predicated region
    $region14: #{tpu_custom_call.1} parent=1 // pred_check
      _
    $region15: #{tpu_custom_call.1} parent=1 // pred_check_branch
      %300 = sbr.rel (0) target = $region17
    $region16: #{tpu_custom_call.1} parent=1 // pred_region
      %301 = dma.done [#allocation3], 1024
    $region17: #{tpu_custom_call.1} parent=1 // pred_fallthru
      _
    %302 = vsyncpa [#allocation3], 1

</llo_original>
